<compile_context>
chip_gen: v7x
topology: tpu7x:2x2x1
jax: 0.10.0
libtpu: 0.0.40
codegen_flags: <defaults>
</compile_context>

<pallas_src>
import jax
import jax.numpy as jnp
from jax import lax
from jax.experimental import pallas as pl
from jax.experimental.pallas import tpu as pltpu

LN_EPS = 1e-5


def _round_up(x, m):
    return (x + m - 1) // m * m


def _cdiv(a, b):
    return (a + b - 1) // b


def _sublane(itemsize):
    # rows per sublane tile for the given element size
    return {4: 8, 2: 16, 1: 32}.get(int(itemsize), 8)


def _usable_vmem_bytes():
    """Per-core VMEM capacity minus headroom for compiler-internal scratch."""
    cap = 64 * 1024 * 1024  # conservative default (v7x has 64 MiB / TC)
    try:
        info = pltpu.get_tpu_info()
        for attr in ("vmem_capacity_bytes", "vmem_bytes", "vmem_size_bytes"):
            v = getattr(info, attr, None)
            if v:
                cap = int(v)
                break
    except Exception:
        pass
    # ~56 MiB usable on v7x, ~112 MiB on v5e/v6e
    return cap - max(8 * 1024 * 1024, cap // 8)


def _const_spec(shape, index_map):
    """BlockSpec for a grid-invariant input: single-buffered."""
    try:
        return pl.BlockSpec(shape, index_map, pipeline_mode=pl.Buffered(1))
    except TypeError:  # older jax without the pipeline_mode kwarg
        return pl.BlockSpec(shape, index_map)


# --------------------------------- kernels ---------------------------------

def _epilogue(hcat_f32, g, be, d_out, d_out_p, out_dtype):
    """Bias-added fused matmul result -> ReLU(LayerNorm(h)) + skip."""
    inv_d = 1.0 / float(d_out)
    h = hcat_f32[:, :d_out_p]          # embed branch (pre-LN)
    skip = hcat_f32[:, d_out_p:]       # skip branch (bias already added)
    # Padded lanes of h are exactly 0 (padded weight columns / biases are 0),
    # so the sum over d_out_p lanes equals the sum over the true d_out lanes.
    mean = jnp.sum(h, axis=-1, keepdims=True) * inv_d
    centered = h - mean
    if d_out != d_out_p:               # static: only mask when padded
        lane = lax.broadcasted_iota(jnp.int32, (1, d_out_p), 1)
        centered = jnp.where(lane < d_out, centered, 0.0)
    var = jnp.sum(centered * centered, axis=-1, keepdims=True) * inv_d
    h_norm = centered * lax.rsqrt(var + LN_EPS)
    h_norm = h_norm * g + be
    embed = jnp.maximum(h_norm, 0.0)
    return (embed + skip).astype(out_dtype)


def _make_resident_kernel(d_out, d_out_p):
    """Single MXU pass over the fully resident fused weight [W1|W2]."""
    def kernel(x_ref, w_ref, b_ref, g_ref, be_ref, o_ref):
        hcat = jnp.dot(x_ref[...], w_ref[...],
                       preferred_element_type=jnp.float32)
        hcat = hcat + b_ref[...]
        o_ref[...] = _epilogue(hcat, g_ref[...], be_ref[...],
                               d_out, d_out_p, o_ref.dtype)
    return kernel


def _make_ktiled_kernel(d_out, d_out_p):
    """d_in reduction tiled over a second ('arbitrary') grid axis with a
    f32 VMEM accumulator; LN/ReLU/skip epilogue on the last K step."""
    def kernel(x_ref, w_ref, b_ref, g_ref, be_ref, o_ref, acc_ref):
        k = pl.program_id(1)

        @pl.when(k == 0)
        def _():
            acc_ref[...] = jnp.zeros_like(acc_ref)

        acc_ref[...] += jnp.dot(x_ref[...], w_ref[...],
                                preferred_element_type=jnp.float32)

        @pl.when(k == pl.num_programs(1) - 1)
        def _():
            hcat = acc_ref[...] + b_ref[...]
            o_ref[...] = _epilogue(hcat, g_ref[...], be_ref[...],
                                   d_out, d_out_p, o_ref.dtype)
    return kernel


# --------------------------------- wrapper ----------------------------------

def prepare_fused_params(params, *, compute_dtype=None, ktile="auto"):
    """Build the fused, lane-padded weights ONCE (hoisted out of the hot path).

    ktile: "auto" (pick resident vs K-tiled from the chip's VMEM budget),
           False/None (force resident), or an int K-tile size (multiple of 128).
    """
    w1, b1, gamma, beta, w2, b2 = (
        params["w1"], params["b1"], params["gamma"], params["beta"],
        params["w2"], params["b2"])
    d_in, d_out = w1.shape
    d_out_p = _round_up(d_out, 128)
    pad_c = d_out_p - d_out
    pad_mat = lambda w: w if pad_c == 0 else jnp.pad(w, ((0, 0), (0, pad_c)))
    pad_vec = lambda v: v if pad_c == 0 else jnp.pad(v, (0, pad_c))

    # Fuse the two linears into a single (d_in, 2*d_out_p) weight matrix.
    w_cat = jnp.concatenate([pad_mat(w1), pad_mat(w2)], axis=1)
    if compute_dtype is not None:
        w_cat = w_cat.astype(compute_dtype)
    b_cat = jnp.concatenate([pad_vec(b1), pad_vec(b2)]
                            ).reshape(1, 2 * d_out_p).astype(jnp.float32)
    g2 = pad_vec(gamma).reshape(1, d_out_p).astype(jnp.float32)
    be2 = pad_vec(beta).reshape(1, d_out_p).astype(jnp.float32)

    w_isz = jnp.dtype(w_cat.dtype).itemsize
    w_bytes = d_in * 2 * d_out_p * w_isz
    usable = _usable_vmem_bytes()

    if ktile == "auto":
        # Resident if the single-buffered fused weight plus the pipeline
        # buffers of a 512-row tile comfortably fit per-core VMEM.
        tm_hint = 512
        pipeline = (2 * tm_hint * d_in * w_isz          # x double-buffer
                    + 2 * tm_hint * d_out_p * 4          # out double-buffer
                    + 2 * tm_hint * 2 * d_out_p * 4      # f32 intermediates
                    + (4 << 20))                         # headroom
        tk = None if (w_bytes + pipeline <= usable) else 512
    elif ktile is False or ktile is None:
        tk = None
    else:
        tk = int(ktile)

    d_in_p = d_in
    if tk is not None:
        tk = max(128, _round_up(tk, 128))
        d_in_p = _round_up(d_in, tk)
        if d_in_p != d_in:
            w_cat = jnp.pad(w_cat, ((0, d_in_p - d_in), (0, 0)))

    return {"w_cat": w_cat, "b_cat": b_cat, "gamma2": g2, "beta2": be2,
            "d_in": d_in, "d_in_p": d_in_p, "d_out": d_out,
            "d_out_p": d_out_p, "tk": tk,
            "compute_dtype": compute_dtype, "usable_vmem": usable}


def skip_embed_final_shallow(x, params, *, tm=512, compute_dtype=None):
    """x: (..., input_dim) -> (..., output_dim).

    `params` may be raw module params (w1/b1/gamma/beta/w2/b2) or the result
    of prepare_fused_params() (preferred: weight fusion/padding done once)."""
    if "w_cat" not in params:
        params = prepare_fused_params(params, compute_dtype=compute_dtype)

    w_cat, b_cat, g2, be2 = (params["w_cat"], params["b_cat"],
                             params["gamma2"], params["beta2"])
    d_in, d_in_p = params["d_in"], params["d_in_p"]
    d_out, d_out_p = params["d_out"], params["d_out_p"]
    tk = params["tk"]
    cdt = params["compute_dtype"]
    usable = params.get("usable_vmem", _usable_vmem_bytes())

    assert x.shape[-1] == d_in
    lead_shape = x.shape[:-1]
    out_dtype = x.dtype
    out_isz = jnp.dtype(out_dtype).itemsize

    x2 = x.reshape(-1, d_in)
    if cdt is not None:
        x2 = x2.astype(cdt)
    x_isz = jnp.dtype(x2.dtype).itemsize
    w_isz = jnp.dtype(w_cat.dtype).itemsize
    n = x2.shape[0]

    # ---- row tiling (dtype-aware sublane multiple, megacore split) --------
    sub = _sublane(x_isz)
    tm_req = _round_up(n, sub)                      # rows actually needed
    tm_eff = min(_round_up(max(tm, sub), sub), tm_req)
    # Give the grid >= 2 row steps when rows allow it (v7x has 2 TCs).
    if tm_eff >= tm_req and tm_req >= 2 * sub:
        tm_eff = _round_up(_cdiv(tm_req, 2), sub)

    # ---- VMEM footprint: each buffer counted exactly once ------------------
    def _needed(tm_rows):
        if tk is None:
            return (2 * tm_rows * d_in_p * x_isz        # x double-buffer
                    + d_in_p * 2 * d_out_p * w_isz       # fused W, Buffered(1)
                    + 2 * tm_rows * d_out_p * out_isz    # out double-buffer
                    + 2 * tm_rows * 2 * d_out_p * 4      # f32 intermediates
                    + (4 << 20))                         # headroom
        return (2 * tm_rows * tk * x_isz                 # x double-buffer
                + 2 * tk * 2 * d_out_p * w_isz           # W K-tile double-buffer
                + 2 * tm_rows * d_out_p * out_isz        # out double-buffer
                + 2 * tm_rows * 2 * d_out_p * 4          # acc scratch + epilogue
                + (4 << 20))

    while _needed(tm_eff) > usable and tm_eff > sub:
        tm_eff = max(sub, _round_up(tm_eff // 2, sub))

    n_pad = _round_up(n, tm_eff)
    if n_pad != n:
        x2 = jnp.pad(x2, ((0, n_pad - n), (0, 0)))
    if d_in_p != d_in:
        x2 = jnp.pad(x2, ((0, 0), (0, d_in_p - d_in)))

    vmem_limit = int(min(max(_needed(tm_eff), 32 * 1024 * 1024), usable))

    cost = pl.CostEstimate(
        flops=2 * n_pad * d_in_p * 2 * d_out_p,
        transcendentals=n_pad,                           # one rsqrt per row
        bytes_accessed=(x2.size * x_isz + w_cat.size * w_isz
                        + (b_cat.size + g2.size + be2.size) * 4
                        + n_pad * d_out_p * out_isz))

    if tk is None:
        grid = (n_pad // tm_eff,)
        in_specs = [
            pl.BlockSpec((tm_eff, d_in_p), lambda i: (i, 0)),          # x rows
            _const_spec((d_in_p, 2 * d_out_p), lambda i: (0, 0)),      # fused W
            _const_spec((1, 2 * d_out_p), lambda i: (0, 0)),           # fused bias
            _const_spec((1, d_out_p), lambda i: (0, 0)),               # gamma
            _const_spec((1, d_out_p), lambda i: (0, 0)),               # beta
        ]
        out_specs = pl.BlockSpec((tm_eff, d_out_p), lambda i: (i, 0))
        scratch_shapes = []
        dim_sem = ("parallel",)
        kernel = _make_resident_kernel(d_out, d_out_p)
    else:
        grid = (n_pad // tm_eff, d_in_p // tk)
        in_specs = [
            pl.BlockSpec((tm_eff, tk), lambda i, k: (i, k)),           # x tile
            pl.BlockSpec((tk, 2 * d_out_p), lambda i, k: (k, 0)),      # W K-tile
            _const_spec((1, 2 * d_out_p), lambda i, k: (0, 0)),        # fused bias
            _const_spec((1, d_out_p), lambda i, k: (0, 0)),            # gamma
            _const_spec((1, d_out_p), lambda i, k: (0, 0)),            # beta
        ]
        out_specs = pl.BlockSpec((tm_eff, d_out_p), lambda i, k: (i, 0))
        scratch_shapes = [pltpu.VMEM((tm_eff, 2 * d_out_p), jnp.float32)]
        dim_sem = ("parallel", "arbitrary")
        kernel = _make_ktiled_kernel(d_out, d_out_p)

    out = pl.pallas_call(
        kernel,
        out_shape=jax.ShapeDtypeStruct((n_pad, d_out_p), out_dtype),
        grid_spec=pltpu.PrefetchScalarGridSpec(
            num_scalar_prefetch=0,
            grid=grid,
            in_specs=in_specs,
            out_specs=out_specs,
            scratch_shapes=scratch_shapes),
        compiler_params=pltpu.CompilerParams(
            dimension_semantics=dim_sem,
            vmem_limit_bytes=vmem_limit),
        cost_estimate=cost,
    )(x2, w_cat, b_cat, g2, be2)

    out = out[:n, :d_out]
    return out.reshape(*lead_shape, d_out)


# ------------------------------ test harness --------------------------------

def init_params(key, input_dim, output_dim, dtype=jnp.float32):
    """Deterministic synthetic init (PyTorch Linear weight is (out, in);
    stored pre-transposed as (in, out) for the kernel)."""
    k1, k2, k3, k4 = jax.random.split(key, 4)
    bound = 1.0 / jnp.sqrt(input_dim)
    return {
        "w1": jax.random.uniform(k1, (input_dim, output_dim), dtype,
                                 minval=-bound, maxval=bound),
        "b1": jax.random.uniform(k2, (output_dim,), dtype,
                                 minval=-bound, maxval=bound),
        "gamma": jnp.ones((output_dim,), dtype),   # LayerNorm weight init
        "beta": jnp.zeros((output_dim,), dtype),   # LayerNorm bias init
        "w2": jax.random.uniform(k3, (input_dim, output_dim), dtype,
                                 minval=-bound, maxval=bound),
        "b2": jax.random.uniform(k4, (output_dim,), dtype,
                                 minval=-bound, maxval=bound),
    }


def _reference(x, params):
    w1, b1, gamma, beta, w2, b2 = (
        params["w1"], params["b1"], params["gamma"], params["beta"],
        params["w2"], params["b2"])
    h = x @ w1 + b1
    mean = jnp.mean(h, axis=-1, keepdims=True)
    var = jnp.mean((h - mean) ** 2, axis=-1, keepdims=True)
    hn = (h - mean) / jnp.sqrt(var + LN_EPS) * gamma + beta
    embed = jnp.maximum(hn, 0.0)
    skip = x @ w2 + b2
    return embed + skip


if __name__ == "__main__":
    batch, seq, input_dim, output_dim = 2, 8, 32, 32

    key = jax.random.PRNGKey(0)
    kx, kp = jax.random.split(key)
    x = jax.random.normal(kx, (batch, seq, input_dim), jnp.float32)
    params = init_params(kp, input_dim, output_dim)

    # Hoisted weight prep: fuse/pad once, reuse across calls.
    fused = prepare_fused_params(params)

    # f32 resident path (exact check against the reference)
    out = jax.block_until_ready(skip_embed_final_shallow(x, fused))
    ref = _reference(x, params)
    assert out.shape == (batch, seq, output_dim)
    assert jnp.allclose(out, ref, atol=1e-5, rtol=1e-5), "f32 mismatch vs reference"

    # ragged row count (exercises wrapper-side row padding + multi-step grid)
    x_odd = jax.random.normal(kx, (batch, 5, input_dim), jnp.float32)
    out_odd = jax.block_until_ready(skip_embed_final_shallow(x_odd, fused))
    ref_odd = _reference(x_odd, params)
    assert out_odd.shape == (batch, 5, output_dim)
    assert jnp.allclose(out_odd, ref_odd, atol=1e-5, rtol=1e-5), "padded-row mismatch"

    # bf16 matmul path (f32 accumulation + f32 LayerNorm), loose tolerance
    fused_bf16 = prepare_fused_params(params, compute_dtype=jnp.bfloat16)
    out_bf16 = jax.block_until_ready(skip_embed_final_shallow(x, fused_bf16))
    assert out_bf16.shape == (batch, seq, output_dim)
    assert float(jnp.max(jnp.abs(out_bf16 - ref))) < 5e-2, "bf16 mismatch vs reference"

    # forced K-tiled path (same kernel v7x picks automatically for large
    # fused weights): d_in reduction over an 'arbitrary' grid axis + f32 acc.
    d_in_big, d_out_big = 256, 64
    kp2, kx2 = jax.random.split(kp)
    params_big = init_params(kp2, d_in_big, d_out_big)
    x_big = jax.random.normal(kx2, (batch, seq, d_in_big), jnp.float32)
    fused_kt = prepare_fused_params(params_big, ktile=128)
    out_kt = jax.block_until_ready(skip_embed_final_shallow(x_big, fused_kt))
    ref_kt = _reference(x_big, params_big)
    assert out_kt.shape == (batch, seq, d_out_big)
    assert jnp.allclose(out_kt, ref_kt, atol=1e-4, rtol=1e-4), "K-tiled mismatch"

    print("KERNEL_OK")
</pallas_src>

<mosaic_0001>
module attributes {stable_mosaic.version = 11 : i64} {
  func.func @kernel(%arg0: i32, %arg1: memref<8x32xf32, #tpu.memory_space<vmem>>, %arg2: memref<32x256xf32, #tpu.memory_space<vmem>>, %arg3: memref<1x256xf32, #tpu.memory_space<vmem>>, %arg4: memref<1x128xf32, #tpu.memory_space<vmem>>, %arg5: memref<1x128xf32, #tpu.memory_space<vmem>>, %arg6: memref<8x128xf32, #tpu.memory_space<vmem>>) attributes {dimension_semantics = [#tpu.dimension_semantics<parallel>], iteration_bounds = array<i64: 2>, scalar_prefetch = 0 : i64, scratch_operands = 0 : i64, tpu.core_type = #tpu.core_type<tc>, window_params = [{transform_indices = @transform_0, window_bounds = array<i64: 8, 32>}, {pipeline_mode = #tpu.pipeline_mode<synchronous>, transform_indices = @transform_1, window_bounds = array<i64: 32, 256>}, {pipeline_mode = #tpu.pipeline_mode<synchronous>, transform_indices = @transform_2, window_bounds = array<i64: 1, 256>}, {pipeline_mode = #tpu.pipeline_mode<synchronous>, transform_indices = @transform_3, window_bounds = array<i64: 1, 128>}, {pipeline_mode = #tpu.pipeline_mode<synchronous>, transform_indices = @transform_4, window_bounds = array<i64: 1, 128>}, {transform_indices = @transform_5, window_bounds = array<i64: 8, 128>}]} {
    %c0 = arith.constant 0 : index
    %c0_0 = arith.constant 0 : index
    %0 = vector.load %arg1[%c0, %c0_0] : memref<8x32xf32, #tpu.memory_space<vmem>>, vector<8x32xf32>
    %c0_1 = arith.constant 0 : index
    %c0_2 = arith.constant 0 : index
    %1 = vector.load %arg2[%c0_1, %c0_2] : memref<32x256xf32, #tpu.memory_space<vmem>>, vector<32x256xf32>
    %cst = arith.constant dense<0.000000e+00> : vector<8x256xf32>
    %2 = tpu.matmul %0, %1, %cst {dimension_numbers = #tpu.dot_dimension_numbers<[1], [0], [0], [1], [0, 0, 1, 1], [], []>} : vector<8x32xf32>, vector<32x256xf32>, vector<8x256xf32> -> vector<8x256xf32>
    %c0_3 = arith.constant 0 : index
    %c0_4 = arith.constant 0 : index
    %3 = vector.load %arg3[%c0_3, %c0_4] : memref<1x256xf32, #tpu.memory_space<vmem>>, vector<1x256xf32>
    %4 = vector.broadcast %3 : vector<1x256xf32> to vector<8x256xf32>
    %5 = arith.addf %2, %4 : vector<8x256xf32>
    %c0_5 = arith.constant 0 : index
    %c0_6 = arith.constant 0 : index
    %6 = vector.load %arg4[%c0_5, %c0_6] : memref<1x128xf32, #tpu.memory_space<vmem>>, vector<1x128xf32>
    %c0_7 = arith.constant 0 : index
    %c0_8 = arith.constant 0 : index
    %7 = vector.load %arg5[%c0_7, %c0_8] : memref<1x128xf32, #tpu.memory_space<vmem>>, vector<1x128xf32>
    %8 = vector.extract_strided_slice %5 {offsets = [0, 0], sizes = [8, 128], strides = [1, 1]} : vector<8x256xf32> to vector<8x128xf32>
    %9 = vector.extract_strided_slice %5 {offsets = [0, 128], sizes = [8, 128], strides = [1, 1]} : vector<8x256xf32> to vector<8x128xf32>
    %cst_9 = arith.constant dense<0.000000e+00> : vector<8xf32>
    %10 = vector.multi_reduction <add>, %8, %cst_9 [1] : vector<8x128xf32> to vector<8xf32>
    %11 = vector.shape_cast %10 : vector<8xf32> to vector<8x1xf32>
    %cst_10 = arith.constant 3.125000e-02 : f32
    %12 = vector.broadcast %cst_10 : f32 to vector<8x1xf32>
    %13 = arith.mulf %11, %12 : vector<8x1xf32>
    %14 = vector.broadcast %13 : vector<8x1xf32> to vector<8x128xf32>
    %15 = arith.subf %8, %14 : vector<8x128xf32>
    %16 = tpu.iota {dimensions = array<i32: 1>} : vector<1x128xi32>
    %c32_i32 = arith.constant 32 : i32
    %17 = vector.broadcast %c32_i32 : i32 to vector<1x128xi32>
    %18 = arith.cmpi slt, %16, %17 : vector<1x128xi32>
    %cst_11 = arith.constant 0.000000e+00 : f32
    %19 = vector.shape_cast %18 : vector<1x128xi1> to vector<1x128xi1>
    %20 = vector.broadcast %19 : vector<1x128xi1> to vector<8x128xi1>
    %21 = vector.broadcast %cst_11 : f32 to vector<8x128xf32>
    %22 = arith.select %20, %15, %21 : vector<8x128xi1>, vector<8x128xf32>
    %23 = arith.mulf %22, %22 : vector<8x128xf32>
    %cst_12 = arith.constant dense<0.000000e+00> : vector<8xf32>
    %24 = vector.multi_reduction <add>, %23, %cst_12 [1] : vector<8x128xf32> to vector<8xf32>
    %25 = vector.shape_cast %24 : vector<8xf32> to vector<8x1xf32>
    %cst_13 = arith.constant 3.125000e-02 : f32
    %26 = vector.broadcast %cst_13 : f32 to vector<8x1xf32>
    %27 = arith.mulf %25, %26 : vector<8x1xf32>
    %cst_14 = arith.constant 9.99999974E-6 : f32
    %28 = vector.broadcast %cst_14 : f32 to vector<8x1xf32>
    %29 = arith.addf %27, %28 : vector<8x1xf32>
    %30 = math.rsqrt %29 : vector<8x1xf32>
    %31 = vector.broadcast %30 : vector<8x1xf32> to vector<8x128xf32>
    %32 = arith.mulf %22, %31 : vector<8x128xf32>
    %33 = vector.broadcast %6 : vector<1x128xf32> to vector<8x128xf32>
    %34 = arith.mulf %32, %33 : vector<8x128xf32>
    %35 = vector.broadcast %7 : vector<1x128xf32> to vector<8x128xf32>
    %36 = arith.addf %34, %35 : vector<8x128xf32>
    %cst_15 = arith.constant 0.000000e+00 : f32
    %37 = vector.broadcast %cst_15 : f32 to vector<8x128xf32>
    %38 = arith.maximumf %36, %37 : vector<8x128xf32>
    %39 = arith.addf %38, %9 : vector<8x128xf32>
    %c0_16 = arith.constant 0 : index
    %c0_17 = arith.constant 0 : index
    %40 = vector.load %arg6[%c0_16, %c0_17] : memref<8x128xf32, #tpu.memory_space<vmem>>, vector<8x128xf32>
    tpu.vector_store %arg6[%c0_16, %c0_17], %39 {strides = array<i32>} : memref<8x128xf32, #tpu.memory_space<vmem>>, vector<8x128xf32>,
    return
  }
  func.func @transform_0(%arg0: i32) -> (i32, i32) {
    %c0_i32 = arith.constant 0 : i32
    %c0_i32_0 = arith.constant 0 : i32
    return %arg0, %c0_i32 : i32, i32
  }
  func.func @transform_1(%arg0: i32) -> (i32, i32) {
    %c0_i32 = arith.constant 0 : i32
    %c0_i32_0 = arith.constant 0 : i32
    %c0_i32_1 = arith.constant 0 : i32
    return %c0_i32, %c0_i32_0 : i32, i32
  }
  func.func @transform_2(%arg0: i32) -> (i32, i32) {
    %c0_i32 = arith.constant 0 : i32
    %c0_i32_0 = arith.constant 0 : i32
    %c0_i32_1 = arith.constant 0 : i32
    return %c0_i32, %c0_i32_0 : i32, i32
  }
  func.func @transform_3(%arg0: i32) -> (i32, i32) {
    %c0_i32 = arith.constant 0 : i32
    %c0_i32_0 = arith.constant 0 : i32
    %c0_i32_1 = arith.constant 0 : i32
    return %c0_i32, %c0_i32_0 : i32, i32
  }
  func.func @transform_4(%arg0: i32) -> (i32, i32) {
    %c0_i32 = arith.constant 0 : i32
    %c0_i32_0 = arith.constant 0 : i32
    %c0_i32_1 = arith.constant 0 : i32
    return %c0_i32, %c0_i32_0 : i32, i32
  }
  func.func @transform_5(%arg0: i32) -> (i32, i32) {
    %c0_i32 = arith.constant 0 : i32
    %c0_i32_0 = arith.constant 0 : i32
    return %arg0, %c0_i32 : i32, i32
  }
}

</mosaic_0001>

<llo_original>
// kernel: tpu_custom_call.1
$region0: #{tpu_custom_call.1}
  #allocation0 [shape = 'u32[]', space=smem, size = 0x4, offset = 0x4, fixed_abs, tag = 'smem constant byte address 0x4 - core index']
  #allocation1 [shape = 'u32[144,128]{1,0:T(1,128)}', space=vmem, size = 0x12000, scoped, tag = 'internal scratch']
  %s0 = inlined_call_operand.hbm [shape: f32[16,32], index: 0, kind: input, shape index: {}]
  %s1 = inlined_call_operand.hbm [shape: f32[32,256], index: 1, kind: input, shape index: {}]
  %s2 = inlined_call_operand.vmem [shape: f32[1,256], index: 2, kind: input, shape index: {}]
  %s3 = inlined_call_operand.vmem [shape: f32[1,128], index: 3, kind: input, shape index: {}]
  %s4 = inlined_call_operand.vmem [shape: f32[1,128], index: 4, kind: input, shape index: {}]
  %s5 = inlined_call_operand.hbm [shape: f32[16,128], index: 5, kind: output, shape index: {}]
  %s6 = sld [smem:[#allocation0]]
  $region61: #{tpu_custom_call.1} parent=0
    _
  %s8 = ssub.s32 1, %s6
  %s9 = scalar_select 0, %s8, %s6
  $region1: #{tpu_custom_call.1} parent=0
    #allocation2 [shape = 'u8[8192]{0}', space=vmem, size = 0x2000, scoped, tag = 'input window, operand 0']
    #allocation3 [shape = 's32[2]{0}', space=sflag, size = 0x8, scoped, tag = 'scoped memory for tpu_custom_call.1']
    #allocation4 [shape = 's32[2]{0}', space=sflag, size = 0x8, scoped, tag = 'scoped memory for tpu_custom_call.1']
    #allocation5 [shape = 'u8[32768]{0}', space=vmem, size = 0x8000, scoped, tag = 'input window, operand 1, single buffered']
    #allocation6 [shape = 's32[1]{0}', space=sflag, size = 0x4, scoped, tag = 'scoped memory for tpu_custom_call.1']
    #allocation7 [shape = 'u8[8192]{0}', space=vmem, size = 0x2000, scoped, tag = 'output window, operand 0']
    %10 = vsyncpa [#allocation3], 0
    %s11 = scalar_lea.sflag [#allocation3], 1
    %12 = vsyncpa %s11, 0
    %13 = vsyncpa [#allocation6], 0
    %14 = vsyncpa [#allocation4], 0
    %s15 = scalar_lea.sflag [#allocation4], 1
    %16 = vsyncpa %s15, 0
    loop: start=0, step=1, limit=4
    $region2: #{tpu_custom_call.1} parent=1 // loop_pre_header
      _
    $region3: #{tpu_custom_call.1} parent=1 // loop_header
      %s18 = sphi 0, %s22
      %p19 = scmp.ge.s32.totalorder %s18, 4
      %s28 = sphi 0, %s30
      %s31 = sphi 0, %s28
      %s32 = sphi 0, %s31
      %s48 = sphi 0, %s32
      %s52 = sphi 0, %s52
      %s54 = sphi 0, %s52
      %s55 = sphi 0, %s54
      %s69 = sphi 0, %s55
      %s73 = sphi 0, %s73
      %s75 = sphi 0, %s73
      %s76 = sphi 0, %s75
      %s90 = sphi 0, %s76
      %s94 = sphi 0, %s94
      %s96 = sphi 0, %s94
      %s97 = sphi 0, %s96
      %s111 = sphi 0, %s97
      %s115 = sphi 0, %s115
      %s117 = sphi 0, %s115
      %s118 = sphi 0, %s117
      %s132 = sphi 0, %s118
      %s138 = sphi 0, %s140
      %s141 = sphi 0, %s138
      %s142 = sphi 0, %s141
      %s158 = sphi 0, %s142
    $region4: #{tpu_custom_call.1} parent=1 // loop_header_branch
      %21 = sbr.rel (%p19) target = $region8
    $region5: #{tpu_custom_call.1} parent=1 // loop_body
      %s23 = ssub.s32 %s18, 1
      %s24 = ssub.s32 %s18, 2
      %s25 = sadd.s32 %s18, 1
      %s26 = ssub.s32 %s18, %s25
      %p27 = scmp.eq.s32.totalorder %s26, 0
      %s29 = sadd.s32 %s28, 1
      %s30 = scalar_select %p27, %s28, %s29
      %p33 = pneg %p27
      %p34 = scmp.eq.s32.totalorder %s18, 1
      %p35 = por %p33, %p34
      %p36 = scmp.ne.s32.totalorder %s28, %s31
      %p37 = scmp.eq.s32.totalorder %s18, 0
      %p38 = por %p36, %p37
      %p39 = scmp.ne.s32.totalorder %s28, %s31
      %p40 = scmp.eq.s32.totalorder %s23, 1
      %p41 = por %p39, %p40
      %p42 = scmp.ne.s32.totalorder %s31, %s32
      %p43 = scmp.eq.s32.totalorder %s23, 0
      %p44 = por %p42, %p43
      %p45 = scmp.ne.s32.totalorder %s31, %s32
      %p46 = scmp.eq.s32.totalorder %s24, 1
      %p47 = por %p45, %p46
      %p49 = scmp.ne.s32.totalorder %s32, %s48
      %p50 = scmp.eq.s32.totalorder %s24, 0
      %p51 = por %p49, %p50
      %s53 = sadd.s32 %s52, 1
      %p56 = scmp.eq.s32.totalorder %s18, 1
      %p57 = scmp.ne.s32.totalorder %s52, %s54
      %p58 = scmp.eq.s32.totalorder %s18, 0
      %p59 = por %p57, %p58
      %p60 = scmp.ne.s32.totalorder %s52, %s54
      %p61 = scmp.eq.s32.totalorder %s23, 1
      %p62 = por %p60, %p61
      %p63 = scmp.ne.s32.totalorder %s54, %s55
      %p64 = scmp.eq.s32.totalorder %s23, 0
      %p65 = por %p63, %p64
      %p66 = scmp.ne.s32.totalorder %s54, %s55
      %p67 = scmp.eq.s32.totalorder %s24, 1
      %p68 = por %p66, %p67
      %p70 = scmp.ne.s32.totalorder %s55, %s69
      %p71 = scmp.eq.s32.totalorder %s24, 0
      %p72 = por %p70, %p71
      %s74 = sadd.s32 %s73, 1
      %p77 = scmp.eq.s32.totalorder %s18, 1
      %p78 = scmp.ne.s32.totalorder %s73, %s75
      %p79 = scmp.eq.s32.totalorder %s18, 0
      %p80 = por %p78, %p79
      %p81 = scmp.ne.s32.totalorder %s73, %s75
      %p82 = scmp.eq.s32.totalorder %s23, 1
      %p83 = por %p81, %p82
      %p84 = scmp.ne.s32.totalorder %s75, %s76
      %p85 = scmp.eq.s32.totalorder %s23, 0
      %p86 = por %p84, %p85
      %p87 = scmp.ne.s32.totalorder %s75, %s76
      %p88 = scmp.eq.s32.totalorder %s24, 1
      %p89 = por %p87, %p88
      %p91 = scmp.ne.s32.totalorder %s76, %s90
      %p92 = scmp.eq.s32.totalorder %s24, 0
      %p93 = por %p91, %p92
      %s95 = sadd.s32 %s94, 1
      %p98 = scmp.eq.s32.totalorder %s18, 1
      %p99 = scmp.ne.s32.totalorder %s94, %s96
      %p100 = scmp.eq.s32.totalorder %s18, 0
      %p101 = por %p99, %p100
      %p102 = scmp.ne.s32.totalorder %s94, %s96
      %p103 = scmp.eq.s32.totalorder %s23, 1
      %p104 = por %p102, %p103
      %p105 = scmp.ne.s32.totalorder %s96, %s97
      %p106 = scmp.eq.s32.totalorder %s23, 0
      %p107 = por %p105, %p106
      %p108 = scmp.ne.s32.totalorder %s96, %s97
      %p109 = scmp.eq.s32.totalorder %s24, 1
      %p110 = por %p108, %p109
      %p112 = scmp.ne.s32.totalorder %s97, %s111
      %p113 = scmp.eq.s32.totalorder %s24, 0
      %p114 = por %p112, %p113
      %s116 = sadd.s32 %s115, 1
      %p119 = scmp.eq.s32.totalorder %s18, 1
      %p120 = scmp.ne.s32.totalorder %s115, %s117
      %p121 = scmp.eq.s32.totalorder %s18, 0
      %p122 = por %p120, %p121
      %p123 = scmp.ne.s32.totalorder %s115, %s117
      %p124 = scmp.eq.s32.totalorder %s23, 1
      %p125 = por %p123, %p124
      %p126 = scmp.ne.s32.totalorder %s117, %s118
      %p127 = scmp.eq.s32.totalorder %s23, 0
      %p128 = por %p126, %p127
      %p129 = scmp.ne.s32.totalorder %s117, %s118
      %p130 = scmp.eq.s32.totalorder %s24, 1
      %p131 = por %p129, %p130
      %p133 = scmp.ne.s32.totalorder %s118, %s132
      %p134 = scmp.eq.s32.totalorder %s24, 0
      %p135 = por %p133, %p134
      %s136 = ssub.s32 %s18, %s25
      %p137 = scmp.eq.s32.totalorder %s136, 0
      %s139 = sadd.s32 %s138, 1
      %s140 = scalar_select %p137, %s138, %s139
      %p143 = pneg %p137
      %p144 = scmp.eq.s32.totalorder %s18, 1
      %p145 = por %p143, %p144
      %p146 = scmp.ne.s32.totalorder %s138, %s141
      %p147 = scmp.eq.s32.totalorder %s18, 0
      %p148 = por %p146, %p147
      %p149 = scmp.ne.s32.totalorder %s138, %s141
      %p150 = scmp.eq.s32.totalorder %s23, 1
      %p151 = por %p149, %p150
      %p152 = scmp.ne.s32.totalorder %s141, %s142
      %p153 = scmp.eq.s32.totalorder %s23, 0
      %p154 = por %p152, %p153
      %p155 = scmp.ne.s32.totalorder %s141, %s142
      %p156 = scmp.eq.s32.totalorder %s24, 1
      %p157 = por %p155, %p156
      %p159 = scmp.ne.s32.totalorder %s142, %s158
      %p160 = scmp.eq.s32.totalorder %s24, 0
      %p161 = por %p159, %p160
      %p162 = scmp.le.s32.totalorder 1, %s18
      %p163 = scmp.lt.s32.totalorder %s18, 3
      %p164 = pnand %p162, %p163
      %p165 = pneg %p164
      // Predicated region
      $region9: #{tpu_custom_call.1} parent=5 // pred_check
        _
      $region10: #{tpu_custom_call.1} parent=5 // pred_check_branch
        %167 = sbr.rel (%p164) target = $region12
      $region11: #{tpu_custom_call.1} parent=5 // pred_region
        %s168 = ssub.s32 %s18, 1
        // Predicated region
        $region13: #{tpu_custom_call.1} parent=11 // pred_check
          %p169 = pneg %p65
        $region14: #{tpu_custom_call.1} parent=11 // pred_check_branch
          %171 = sbr.rel (%p169) target = $region16
        $region15: #{tpu_custom_call.1} parent=11 // pred_region
          %s173 = ssub.s32 1024, 1024
          %174 = vsyncadd [#allocation6], %s173
          %s175 = sshll.u32 [#allocation5], 4
          %s176 = int_to_ptr.vmem [resolvable:$true] %s175
          %181 = dma.hbm_to_vmem [thread:$0]  %s1, 1024, %s176, [#allocation6], 256, 256, 16
        $region16: #{tpu_custom_call.1} parent=11 // pred_fallthru
          _
        // Predicated region
        $region17: #{tpu_custom_call.1} parent=11 // pred_check
          %p182 = pneg %p86
        $region18: #{tpu_custom_call.1} parent=11 // pred_check_branch
          %184 = sbr.rel (%p182) target = $region20
        $region19: #{tpu_custom_call.1} parent=11 // pred_region
          _
        $region20: #{tpu_custom_call.1} parent=11 // pred_fallthru
          _
        // Predicated region
        $region21: #{tpu_custom_call.1} parent=11 // pred_check
          %p185 = pneg %p107
        $region22: #{tpu_custom_call.1} parent=11 // pred_check_branch
          %187 = sbr.rel (%p185) target = $region24
        $region23: #{tpu_custom_call.1} parent=11 // pred_region
          _
        $region24: #{tpu_custom_call.1} parent=11 // pred_fallthru
          _
        // Predicated region
        $region25: #{tpu_custom_call.1} parent=11 // pred_check
          %p188 = pneg %p128
        $region26: #{tpu_custom_call.1} parent=11 // pred_check_branch
          %190 = sbr.rel (%p188) target = $region28
        $region27: #{tpu_custom_call.1} parent=11 // pred_region
          _
        $region28: #{tpu_custom_call.1} parent=11 // pred_fallthru
          _
      $region12: #{tpu_custom_call.1} parent=5 // pred_fallthru
        _
      %p191 = scmp.lt.s32.totalorder %s18, 2
      // Predicated region
      $region29: #{tpu_custom_call.1} parent=5 // pred_check
        %p192 = pneg %p191
      $region30: #{tpu_custom_call.1} parent=5 // pred_check_branch
        %194 = sbr.rel (%p192) target = $region32
      $region31: #{tpu_custom_call.1} parent=5 // pred_region
        // Predicated region
        $region33: #{tpu_custom_call.1} parent=31 // pred_check
          %p195 = pneg %p38
        $region34: #{tpu_custom_call.1} parent=31 // pred_check_branch
          %197 = sbr.rel (%p195) target = $region36
        $region35: #{tpu_custom_call.1} parent=31 // pred_region
          %s198 = sand.u32 %s28, 1
          %s199 = scalar_lea.sflag [#allocation3], %s198
          %s200 = sand.u32 %s28, 1
          %s201 = smul.addr %s200, 8
          %s202 = scalar_lea.vmem [#allocation2], %s201
          %s204 = ssub.s32 128, 128
          %205 = vsyncadd %s199, %s204
          %s206 = smul.addr %s18, 128
          %s207 = scalar_lea.hbm %s0, %s206
          %s209 = sshll.u32 %s202, 4
          %s210 = int_to_ptr.vmem [resolvable:$true] %s209
          %212 = dma.hbm_to_vmem [thread:$0]  %s207, 128, %s210, %s199
        $region36: #{tpu_custom_call.1} parent=31 // pred_fallthru
          _
      $region32: #{tpu_custom_call.1} parent=5 // pred_fallthru
        _
      %p213 = scmp.le.s32.totalorder 1, %s18
      %p214 = scmp.lt.s32.totalorder %s18, 3
      %p215 = pnand %p213, %p214
      %p216 = pneg %p215
      // Predicated region
      $region37: #{tpu_custom_call.1} parent=5 // pred_check
        _
      $region38: #{tpu_custom_call.1} parent=5 // pred_check_branch
        %218 = sbr.rel (%p215) target = $region40
      $region39: #{tpu_custom_call.1} parent=5 // pred_region
        %s219 = ssub.s32 %s18, 1
        %s220 = sand.u32 %s31, 1
        %s221 = scalar_lea.sflag [#allocation3], %s220
        %s222 = sand.u32 %s31, 1
        %s223 = smul.addr %s222, 8
        %s224 = scalar_lea.vmem [#allocation2], %s223
        // Predicated region
        $region41: #{tpu_custom_call.1} parent=39 // pred_check
          %p225 = pneg %p44
        $region42: #{tpu_custom_call.1} parent=39 // pred_check_branch
          %227 = sbr.rel (%p225) target = $region44
        $region43: #{tpu_custom_call.1} parent=39 // pred_region
          %228 = dma.done %s221, 128
        $region44: #{tpu_custom_call.1} parent=39 // pred_fallthru
          _
        // Predicated region
        $region45: #{tpu_custom_call.1} parent=39 // pred_check
          %p229 = pneg %p65
        $region46: #{tpu_custom_call.1} parent=39 // pred_check_branch
          %231 = sbr.rel (%p229) target = $region48
        $region47: #{tpu_custom_call.1} parent=39 // pred_region
          %232 = dma.done [#allocation6], 1024
        $region48: #{tpu_custom_call.1} parent=39 // pred_fallthru
          _
        %s233 = sand.u32 %s31, 1
        %s234 = scalar_lea.sflag [#allocation3], %s233
        %s235 = sand.u32 %s31, 1
        %s236 = smul.addr %s235, 8
        %s237 = scalar_lea.vmem [#allocation2], %s236
        %p238 = pneg %p44
        %p239 = pneg %p41
        %p240 = pneg %p65
        %p241 = pneg %p62
        %p242 = pneg %p86
        %p243 = pneg %p83
        %p244 = pneg %p107
        %p245 = pneg %p104
        %p246 = pneg %p128
        %p247 = pneg %p125
        %p248 = pneg %p154
        %p249 = pneg %p151
        %s250 = sand.u32 %s141, 1
        %s251 = scalar_lea.sflag [#allocation4], %s250
        %s252 = sand.u32 %s141, 1
        %s253 = smul.addr %s252, 8
        %s254 = scalar_lea.vmem [#allocation7], %s253
        %v255 = vld [vmem:[%s224] sm:$0xff]
        %v256 = vld [vmem:[#allocation5] sm:$0xff]
        %v257 = vld [vmem:[#allocation5 + $0x8] sm:$0xff]
        %v258 = vld [vmem:[#allocation5 + $0x10] sm:$0xff]
        %v259 = vld [vmem:[#allocation5 + $0x18] sm:$0xff]
        %v260 = vld [vmem:[#allocation5 + $0x20] sm:$0xff]
        %v261 = vld [vmem:[#allocation5 + $0x28] sm:$0xff]
        %v262 = vld [vmem:[#allocation5 + $0x30] sm:$0xff]
        %v263 = vld [vmem:[#allocation5 + $0x38] sm:$0xff]
        %v264 = vld [vmem:[%s2] sm:$0x3]
        %v266 = vlaneseq
        %v267 = vshrl.u32 %v266, 7
        %v268 = vsub.s32 0, %v267
        %v269 = vrot.slane %v264, %v268
        %v270 = vlaneseq
        %v271 = vshrl.u32 %v270, 7
        %v272 = vsub.s32 1, %v271
        %v273 = vrot.slane %v264, %v272
        %vm276 = vcmask 261120
        %v278 = vsel %vm276, %v255, 0
        %280 = vmatprep.subr.mxu0 %v257
        %281 = vmatpush1.msra.mxu0 %v256
        %282 = vmatprep.subr.mxu0 %v259
        %283 = vmatpush1.msra.mxu0 %v258
        %284 = vmatprep.subr.mxu0 %v261
        %285 = vmatpush1.msra.mxu0 %v260
        %286 = vmatprep.subr.mxu0 %v263
        %287 = vmatpush1.msra.mxu0 %v262
        %288 = vmatprep.subr.mxu0 0.0
        %289 = vmatpush1.msra.mxu0 0.0
        %290 = vmatprep.subr.mxu0 0.0
        %291 = vmatpush1.msra.mxu0 0.0
        %292 = vmatprep.subr.mxu0 0.0
        %293 = vmatpush1.msra.mxu0 0.0
        %294 = vmatprep.subr.mxu0 0.0
        %295 = vmatpush1.msra.mxu0 0.0
        %296 = vmatprep.subr.mxu0 0.0
        %297 = vmatpush1.msra.mxu0 0.0
        %298 = vmatprep.subr.mxu0 0.0
        %299 = vmatpush1.msra.mxu0 0.0
        %300 = vmatprep.subr.mxu0 0.0
        %301 = vmatpush1.msra.mxu0 0.0
        %302 = vmatprep.subr.mxu0 0.0
        %303 = vmatpush1.msra.mxu0 0.0
        %304 = vmatprep.subr.mxu0 0.0
        %305 = vmatpush1.msra.mxu0 0.0
        %306 = vmatprep.subr.mxu0 0.0
        %307 = vmatpush1.msra.mxu0 0.0
        %308 = vmatprep.subr.mxu0 0.0
        %309 = vmatpush1.msra.mxu0 0.0
        %310 = vmatprep.subr.mxu0 0.0
        %311 = vmatpush1.msra.mxu0 0.0
        %312 = vmatprep.subr.mxu0 0.0
        %313 = vmatpush1.msra.mxu0 0.0
        %314 = vmatprep.subr.mxu0 0.0
        %315 = vmatpush1.msra.mxu0 0.0
        %316 = vmatprep.subr.mxu0 0.0
        %317 = vmatpush1.msra.mxu0 0.0
        %318 = vmatprep.subr.mxu0 0.0
        %319 = vmatpush1.msra.mxu0 0.0
        %320 = vmatprep.subr.mxu0 0.0
        %321 = vmatpush1.msra.mxu0 0.0
        %322 = vmatprep.subr.mxu0 0.0
        %323 = vmatpush1.msra.mxu0 0.0
        %324 = vmatprep.subr.mxu0 0.0
        %325 = vmatpush1.msra.mxu0 0.0
        %326 = vmatprep.subr.mxu0 0.0
        %327 = vmatpush1.msra.mxu0 0.0
        %328 = vmatprep.subr.mxu0 0.0
        %329 = vmatpush1.msra.mxu0 0.0
        %330 = vmatprep.subr.mxu0 0.0
        %331 = vmatpush1.msra.mxu0 0.0
        %332 = vmatprep.subr.mxu0 0.0
        %333 = vmatpush1.msra.mxu0 0.0
        %334 = vmatprep.subr.mxu0 0.0
        %335 = vmatpush1.msra.mxu0 0.0
        %336 = vmatprep.subr.mxu0 0.0
        %337 = vmatpush1.msra.mxu0 0.0
        %338 = vmatprep.subr.mxu0 0.0
        %339 = vmatpush1.msra.mxu0 0.0
        %340 = vmatprep.subr.mxu0 0.0
        %341 = vmatpush1.msra.mxu0 0.0
        %342 = vmatprep.subr.mxu0 0.0
        %343 = vmatpush1.msra.mxu0 0.0
        %344 = vmatprep.mubr.f32.mxu0 0.0
        %345 = vmatmul.mubr.f32.gmra.mrb[0].mxu0 %v278
        %v346 = vpop.f32.mrb[0].mxu0
        %v347 = vadd.f32 %v269, %v346
        %v348 = vpop.f32.mrb[0].mxu0
        %v349 = vadd.f32 %v273, %v348
        %350 = vdwg.mxu0
        %v351 = vld [vmem:[%s3] sm:$0x1]
        %v352 = vld [vmem:[%s4] sm:$0x1]
        %353 = vadd.xlane.f32.xlu0 %v347
        %v354 = vpop.xlane.xlu0 %353
        %v355 = vmul.f32 %v354, 0.03125
        %v356 = vsub.f32 %v347, %v355
        %v357 = vlaneseq
        %v358 = vand.u32 %v357, 127
        %vm359 = vcmp.lt.s32.totalorder %v358, 32
        %v360 = vsel %vm359, 1, 0
        %vm361 = vcmp.eq.s32.totalorder %v360, 1
        %v362 = vsel %vm361, %v356, 0.0
        %v363 = vmul.f32 %v362, %v362
        %364 = vadd.xlane.f32.xlu0 %v363
        %v365 = vpop.xlane.xlu0 %364
        %v366 = vmul.f32 %v365, 0.03125
        %v367 = vadd.f32 %v366, 1e-05
        %v368 = vrsqrt.pop %v367
        %v369 = vmul.f32 %v362, %v368
        %v371 = vlaneseq
        %v372 = vshrl.u32 %v371, 7
        %v373 = vsub.s32 0, %v372
        %v374 = vrot.slane %v351, %v373
        %v376 = vmul.f32 %v369, %v374
        %v378 = vlaneseq
        %v379 = vshrl.u32 %v378, 7
        %v380 = vsub.s32 0, %v379
        %v381 = vrot.slane %v352, %v380
        %v383 = vadd.f32 %v376, %v381
        %v384 = vmax.f32 %v383, 0.0
        %v385 = vadd.f32 %v384, %v349
        %386 = vst [vmem:[%s254] sm:$0xff] %v385
        %s387 = sand.u32 %s141, 1
        %s388 = scalar_lea.sflag [#allocation4], %s387
        %s389 = sand.u32 %s141, 1
        %s390 = smul.addr %s389, 8
        %s391 = scalar_lea.vmem [#allocation7], %s390
        // Predicated region
        $region49: #{tpu_custom_call.1} parent=39 // pred_check
          %p392 = pneg %p151
        $region50: #{tpu_custom_call.1} parent=39 // pred_check_branch
          %394 = sbr.rel (%p392) target = $region52
        $region51: #{tpu_custom_call.1} parent=39 // pred_region
          %s396 = ssub.s32 128, 128
          %397 = vsyncadd %s388, %s396
          %s398 = smul.addr %s23, 128
          %s399 = scalar_lea.hbm %s5, %s398
          %s401 = sshll.u32 %s391, 4
          %s402 = int_to_ptr.vmem [resolvable:$true] %s401
          %404 = dma.vmem_to_hbm [thread:$0]  %s402, 128, %s399, %s388
        $region52: #{tpu_custom_call.1} parent=39 // pred_fallthru
          _
      $region40: #{tpu_custom_call.1} parent=5 // pred_fallthru
        _
      %p405 = scmp.le.s32.totalorder 2, %s18
      // Predicated region
      $region53: #{tpu_custom_call.1} parent=5 // pred_check
        %p406 = pneg %p405
      $region54: #{tpu_custom_call.1} parent=5 // pred_check_branch
        %408 = sbr.rel (%p406) target = $region56
      $region55: #{tpu_custom_call.1} parent=5 // pred_region
        %s409 = ssub.s32 %s18, 2
        // Predicated region
        $region57: #{tpu_custom_call.1} parent=55 // pred_check
          %p410 = pneg %p157
        $region58: #{tpu_custom_call.1} parent=55 // pred_check_branch
          %412 = sbr.rel (%p410) target = $region60
        $region59: #{tpu_custom_call.1} parent=55 // pred_region
          %s413 = sand.u32 %s142, 1
          %s414 = scalar_lea.sflag [#allocation4], %s413
          %s415 = sand.u32 %s142, 1
          %s416 = smul.addr %s415, 8
          %s417 = scalar_lea.vmem [#allocation7], %s416
          %418 = dma.done %s414, 128
        $region60: #{tpu_custom_call.1} parent=55 // pred_fallthru
          _
      $region56: #{tpu_custom_call.1} parent=5 // pred_fallthru
        _
    $region6: #{tpu_custom_call.1} parent=1 // loop_footer
      %s22 = sadd.s32 1, %s18
    $region7: #{tpu_custom_call.1} parent=1 // loop_footer_branch
      %17 = sbr.rel target = $region3
    $region8: #{tpu_custom_call.1} parent=1 // loop_exit
      _
    %419 = vsyncpa [#allocation3], 1
    %s420 = scalar_lea.sflag [#allocation3], 1
    %421 = vsyncpa %s420, 1
    %422 = vsyncpa [#allocation6], 1
    %423 = vsyncpa [#allocation4], 1
    %s424 = scalar_lea.sflag [#allocation4], 1
    %425 = vsyncpa %s424, 1

</llo_original>
